<compile_context>
chip_gen: v7x
topology: tpu7x:2x2x1
jax: 0.10.0
libtpu: 0.0.40
codegen_flags: <defaults>
</compile_context>

<pallas_src>
import jax
import jax.numpy as jnp
from jax import lax
from jax.experimental import pallas as pl
from jax.experimental.pallas import tpu as pltpu

_EPS_LAM = 1e-8   # module's lam epsilon
_EPS_LN = 1e-5    # torch.nn.LayerNorm default eps


# ----------------------------------------------------------------------------
# Kernel bodies
# ----------------------------------------------------------------------------
def _euler_body(r2, p2, th, wk, b_lam, b_th, w_im, b_im, norm):
    # ---- explicit (polar) branch: one log, one MXU mix for all output fields ----
    lam = 0.5 * jnp.log(r2 * r2 + p2 * p2 + _EPS_LAM)                      # (Bt, K)
    lam_o = jnp.exp(jnp.dot(lam, wk, preferred_element_type=jnp.float32)
                    + b_lam)                                               # (Bt, FD)
    th_o = jnp.dot(th, wk, preferred_element_type=jnp.float32) + b_th      # (Bt, FD)

    # ---- implicit (linear) branch: one fused matmul per input over all fields ---
    r_im = jnp.maximum(
        jnp.dot(r2, w_im, preferred_element_type=jnp.float32) + b_im, 0.0)
    p_im = jnp.maximum(
        jnp.dot(p2, w_im, preferred_element_type=jnp.float32) + b_im, 0.0)

    o_r = r_im + lam_o * jnp.cos(th_o)                                     # (Bt, FD)
    o_p = p_im + lam_o * jnp.sin(th_o)

    if norm is not None:
        # Segmented LayerNorm over each D-wide segment via a block-diagonal
        # averaging matmul (keeps the lane-dense FD layout; runs on the MXU).
        a, g_r, be_r, g_p, be_p = norm

        def _seg_layernorm(x, g, b):
            mu = jnp.dot(x, a, preferred_element_type=jnp.float32)
            d = x - mu
            var = jnp.dot(d * d, a, preferred_element_type=jnp.float32)
            return d * lax.rsqrt(var + _EPS_LN) * g + b

        o_r = _seg_layernorm(o_r, g_r, be_r)
        o_p = _seg_layernorm(o_p, g_p, be_p)
    return o_r, o_p


def _kernel_with_norm(r_ref, p_ref, th_ref,
                      wk_ref, b_lam_ref, b_th_ref, w_im_ref, b_im_ref,
                      a_ref, g_r_ref, be_r_ref, g_p_ref, be_p_ref,
                      or_ref, op_ref):
    o_r, o_p = _euler_body(
        r_ref[...], p_ref[...], th_ref[...],
        wk_ref[...], b_lam_ref[...], b_th_ref[...], w_im_ref[...], b_im_ref[...],
        (a_ref[...], g_r_ref[...], be_r_ref[...], g_p_ref[...], be_p_ref[...]))
    or_ref[...] = o_r
    op_ref[...] = o_p


def _kernel_no_norm(r_ref, p_ref, th_ref,
                    wk_ref, b_lam_ref, b_th_ref, w_im_ref, b_im_ref,
                    or_ref, op_ref):
    o_r, o_p = _euler_body(
        r_ref[...], p_ref[...], th_ref[...],
        wk_ref[...], b_lam_ref[...], b_th_ref[...], w_im_ref[...], b_im_ref[...],
        None)
    or_ref[...] = o_r
    op_ref[...] = o_p


# ----------------------------------------------------------------------------
# Wrapper
# ----------------------------------------------------------------------------
def _round_up(x, m):
    return ((x + m - 1) // m) * m


def _pick_batch_tile(batch, K, FD):
    """Largest batch tile whose working set fits a conservative VMEM budget."""
    budget = 40 * 1024 * 1024                                 # headroom on v7x 64MiB
    weight_bytes = (2 * K * FD + FD * FD + 6 * FD) * 4        # VMEM-resident weights
    # double-buffered input/output streams + a few (bt, FD) f32 temporaries
    row_bytes = ((3 * K + 2 * FD) * 2 + 8 * FD) * 4
    bt = 8
    for cand in (512, 256, 128, 64, 32, 16, 8):
        if weight_bytes + cand * row_bytes <= budget:
            bt = cand
            break
    # Don't pad a small batch up to a huge tile.
    return min(bt, _round_up(batch, 8))


def euler_interaction_layer(r, p, params, apply_norm=True, batch_tile=None):
    """Pallas implementation of EulerInteractionLayer.forward((r, p))."""
    B, Fin, D = r.shape
    W = params["inter_orders"].astype(jnp.float32)             # (Fin, Fout)
    Fout = W.shape[1]
    K, FD = Fin * D, Fout * D

    # ---- flat, lane-dense activations (pure glue) ----------------------------
    r2 = r.reshape(B, K).astype(jnp.float32)
    p2 = p.reshape(B, K).astype(jnp.float32)
    # TODO(synk): atan2 computed in plain JAX (elementwise glue) — Mosaic lowering
    # for arctan2 inside the kernel is not relied on.
    th2 = jnp.arctan2(p2, r2)

    # ---- parameter re-layout (pure glue, done once) ---------------------------
    eye_d = jnp.eye(D, dtype=jnp.float32)
    w_kron = jnp.kron(W, eye_d)                                 # (K, FD)
    # bias_lam / bias_theta are (1, D, Fout): flat index o*D+d  <-  [0, d, o]
    b_lam = jnp.transpose(params["bias_lam"][0]).reshape(1, FD).astype(jnp.float32)
    b_th = jnp.transpose(params["bias_theta"][0]).reshape(1, FD).astype(jnp.float32)
    # im.weight is (outshape, inshape) = (FD, K); the kernel wants (K, FD).
    w_im = jnp.transpose(params["im_weight"]).astype(jnp.float32)           # (K, FD)
    b_im = params["im_bias"].reshape(1, FD).astype(jnp.float32)

    # ---- batch tiling (pad to a tile multiple so any B works) -----------------
    bt = batch_tile if batch_tile is not None else _pick_batch_tile(B, K, FD)
    B_pad = _round_up(B, bt)
    if B_pad != B:
        pad = ((0, B_pad - B), (0, 0))
        r2 = jnp.pad(r2, pad)
        p2 = jnp.pad(p2, pad)
        th2 = jnp.pad(th2, pad)
    grid = (B_pad // bt,)

    row = lambda i: (i, 0)        # batch-tiled arrays
    const2 = lambda i: (0, 0)     # weights resident across batch tiles

    in_specs = [
        pl.BlockSpec((bt, K), row),       # r (flat)
        pl.BlockSpec((bt, K), row),       # p (flat)
        pl.BlockSpec((bt, K), row),       # theta (flat)
        pl.BlockSpec((K, FD), const2),    # inter_orders ⊗ I_D
        pl.BlockSpec((1, FD), const2),    # bias_lam (flat)
        pl.BlockSpec((1, FD), const2),    # bias_theta (flat)
        pl.BlockSpec((K, FD), const2),    # im weight (K, FD)
        pl.BlockSpec((1, FD), const2),    # im bias
    ]
    operands = [r2, p2, th2, w_kron, b_lam, b_th, w_im, b_im]

    if apply_norm:
        # Block-diagonal segment-averaging matrix + tiled LayerNorm affine params.
        a_mean = jnp.kron(jnp.eye(Fout, dtype=jnp.float32),
                          jnp.full((D, D), 1.0 / D, jnp.float32))           # (FD, FD)
        g_r = jnp.tile(params["norm_r_weight"].astype(jnp.float32), Fout).reshape(1, FD)
        be_r = jnp.tile(params["norm_r_bias"].astype(jnp.float32), Fout).reshape(1, FD)
        g_p = jnp.tile(params["norm_p_weight"].astype(jnp.float32), Fout).reshape(1, FD)
        be_p = jnp.tile(params["norm_p_bias"].astype(jnp.float32), Fout).reshape(1, FD)
        in_specs += [
            pl.BlockSpec((FD, FD), const2),   # segment-mean matrix
            pl.BlockSpec((1, FD), const2),    # norm_r gamma (tiled)
            pl.BlockSpec((1, FD), const2),    # norm_r beta
            pl.BlockSpec((1, FD), const2),    # norm_p gamma
            pl.BlockSpec((1, FD), const2),    # norm_p beta
        ]
        operands += [a_mean, g_r, be_r, g_p, be_p]
        kernel = _kernel_with_norm
    else:
        kernel = _kernel_no_norm

    grid_spec = pltpu.PrefetchScalarGridSpec(
        num_scalar_prefetch=0,
        grid=grid,
        in_specs=in_specs,
        out_specs=[
            pl.BlockSpec((bt, FD), row),      # o_r (flat, lane-dense)
            pl.BlockSpec((bt, FD), row),      # o_p (flat, lane-dense)
        ],
    )

    o_r_flat, o_p_flat = pl.pallas_call(
        kernel,
        out_shape=(jax.ShapeDtypeStruct((B_pad, FD), jnp.float32),
                   jax.ShapeDtypeStruct((B_pad, FD), jnp.float32)),
        grid_spec=grid_spec,
        compiler_params=pltpu.CompilerParams(
            dimension_semantics=("parallel",)),   # independent batch tiles
    )(*operands)

    if B_pad != B:
        o_r_flat = o_r_flat[:B]
        o_p_flat = o_p_flat[:B]

    # Free reshapes back to (B, Fout, D).
    return o_r_flat.reshape(B, Fout, D), o_p_flat.reshape(B, Fout, D)


# ----------------------------------------------------------------------------
# Pure-JAX reference (mirror of the PyTorch forward) for validation
# ----------------------------------------------------------------------------
def euler_interaction_reference(r, p, params, apply_norm=True):
    B, Fin, D = r.shape
    W = params["inter_orders"]
    lam = r ** 2 + p ** 2 + _EPS_LAM
    theta = jnp.arctan2(p, r)
    lam = 0.5 * jnp.log(lam)
    lam_t = jnp.swapaxes(lam, -2, -1) @ W + params["bias_lam"]     # (B, D, Fout)
    th_t = jnp.swapaxes(theta, -2, -1) @ W + params["bias_theta"]  # (B, D, Fout)
    lam_t = jnp.exp(lam_t)
    lam2 = jnp.swapaxes(lam_t, -2, -1)                             # (B, Fout, D)
    th2 = jnp.swapaxes(th_t, -2, -1)
    Fout = W.shape[1]
    rf = jax.nn.relu(r.reshape(B, -1) @ params["im_weight"].T + params["im_bias"])
    pf = jax.nn.relu(p.reshape(B, -1) @ params["im_weight"].T + params["im_bias"])
    r_im = rf.reshape(B, Fout, D)
    p_im = pf.reshape(B, Fout, D)
    o_r = r_im + lam2 * jnp.cos(th2)
    o_p = p_im + lam2 * jnp.sin(th2)
    if apply_norm:
        def ln(x, g, b):
            mu = x.mean(-1, keepdims=True)
            var = ((x - mu) ** 2).mean(-1, keepdims=True)
            return (x - mu) / jnp.sqrt(var + _EPS_LN) * g + b
        o_r = ln(o_r, params["norm_r_weight"], params["norm_r_bias"])
        o_p = ln(o_p, params["norm_p_weight"], params["norm_p_bias"])
    return o_r, o_p


if __name__ == "__main__":
    B, Fin, Fout, D = 8, 4, 8, 16
    inshape, outshape = Fin * D, Fout * D

    key = jax.random.PRNGKey(0)
    ks = jax.random.split(key, 8)
    r = jax.random.normal(ks[0], (B, Fin, D), jnp.float32)
    p = jax.random.normal(ks[1], (B, Fin, D), jnp.float32)

    # Deterministic parameter init mirroring EulerInteractionLayer.__init__.
    if inshape == outshape:
        inter_orders = jnp.eye(Fin, Fout, dtype=jnp.float32)
    else:
        inter_orders = jax.nn.softmax(
            jax.random.normal(ks[2], (Fin, Fout), jnp.float32) / 0.01, axis=0)
    xav = (6.0 / (inshape + outshape)) ** 0.5           # xavier_uniform bound
    im_weight = jax.random.uniform(ks[3], (outshape, inshape), jnp.float32, -xav, xav)
    bb = 1.0 / (inshape ** 0.5)                         # nn.Linear default bias init
    im_bias = jax.random.uniform(ks[4], (outshape,), jnp.float32, -bb, bb)
    bias_lam = 0.01 * jax.random.normal(ks[5], (1, D, Fout), jnp.float32)
    bias_theta = 0.01 * jax.random.normal(ks[6], (1, D, Fout), jnp.float32)

    params = dict(
        inter_orders=inter_orders,
        im_weight=im_weight, im_bias=im_bias,
        bias_lam=bias_lam, bias_theta=bias_theta,
        norm_r_weight=jnp.ones((D,), jnp.float32),
        norm_r_bias=jnp.zeros((D,), jnp.float32),
        norm_p_weight=jnp.ones((D,), jnp.float32),
        norm_p_bias=jnp.zeros((D,), jnp.float32),
    )

    # --- with LayerNorm ---
    o_r, o_p = euler_interaction_layer(r, p, params, apply_norm=True)
    jax.block_until_ready((o_r, o_p))
    ref_r, ref_p = euler_interaction_reference(r, p, params, apply_norm=True)
    assert o_r.shape == (B, Fout, D) and o_p.shape == (B, Fout, D)
    assert jnp.allclose(o_r, ref_r, atol=5e-4, rtol=5e-4), \
        float(jnp.max(jnp.abs(o_r - ref_r)))
    assert jnp.allclose(o_p, ref_p, atol=5e-4, rtol=5e-4), \
        float(jnp.max(jnp.abs(o_p - ref_p)))

    # --- without LayerNorm (exercise the no-norm kernel path) ---
    o_r2, o_p2 = euler_interaction_layer(r, p, params, apply_norm=False)
    jax.block_until_ready((o_r2, o_p2))
    ref_r2, ref_p2 = euler_interaction_reference(r, p, params, apply_norm=False)
    assert jnp.allclose(o_r2, ref_r2, atol=5e-4, rtol=5e-4), \
        float(jnp.max(jnp.abs(o_r2 - ref_r2)))
    assert jnp.allclose(o_p2, ref_p2, atol=5e-4, rtol=5e-4), \
        float(jnp.max(jnp.abs(o_p2 - ref_p2)))

    print("KERNEL_OK")
</pallas_src>

<mosaic_0001>
module attributes {stable_mosaic.version = 11 : i64} {
  func.func @_kernel_with_norm(%arg0: i32, %arg1: memref<8x64xf32, #tpu.memory_space<vmem>>, %arg2: memref<8x64xf32, #tpu.memory_space<vmem>>, %arg3: memref<8x64xf32, #tpu.memory_space<vmem>>, %arg4: memref<64x128xf32, #tpu.memory_space<vmem>>, %arg5: memref<1x128xf32, #tpu.memory_space<vmem>>, %arg6: memref<1x128xf32, #tpu.memory_space<vmem>>, %arg7: memref<64x128xf32, #tpu.memory_space<vmem>>, %arg8: memref<1x128xf32, #tpu.memory_space<vmem>>, %arg9: memref<128x128xf32, #tpu.memory_space<vmem>>, %arg10: memref<1x128xf32, #tpu.memory_space<vmem>>, %arg11: memref<1x128xf32, #tpu.memory_space<vmem>>, %arg12: memref<1x128xf32, #tpu.memory_space<vmem>>, %arg13: memref<1x128xf32, #tpu.memory_space<vmem>>, %arg14: memref<8x128xf32, #tpu.memory_space<vmem>>, %arg15: memref<8x128xf32, #tpu.memory_space<vmem>>) attributes {dimension_semantics = [#tpu.dimension_semantics<parallel>], iteration_bounds = array<i64: 1>, scalar_prefetch = 0 : i64, scratch_operands = 0 : i64, tpu.core_type = #tpu.core_type<tc>, window_params = [{transform_indices = @transform_0, window_bounds = array<i64: 8, 64>}, {transform_indices = @transform_1, window_bounds = array<i64: 8, 64>}, {transform_indices = @transform_2, window_bounds = array<i64: 8, 64>}, {pipeline_mode = #tpu.pipeline_mode<synchronous>, transform_indices = @transform_3, window_bounds = array<i64: 64, 128>}, {pipeline_mode = #tpu.pipeline_mode<synchronous>, transform_indices = @transform_4, window_bounds = array<i64: 1, 128>}, {pipeline_mode = #tpu.pipeline_mode<synchronous>, transform_indices = @transform_5, window_bounds = array<i64: 1, 128>}, {pipeline_mode = #tpu.pipeline_mode<synchronous>, transform_indices = @transform_6, window_bounds = array<i64: 64, 128>}, {pipeline_mode = #tpu.pipeline_mode<synchronous>, transform_indices = @transform_7, window_bounds = array<i64: 1, 128>}, {pipeline_mode = #tpu.pipeline_mode<synchronous>, transform_indices = @transform_8, window_bounds = array<i64: 128, 128>}, {pipeline_mode = #tpu.pipeline_mode<synchronous>, transform_indices = @transform_9, window_bounds = array<i64: 1, 128>}, {pipeline_mode = #tpu.pipeline_mode<synchronous>, transform_indices = @transform_10, window_bounds = array<i64: 1, 128>}, {pipeline_mode = #tpu.pipeline_mode<synchronous>, transform_indices = @transform_11, window_bounds = array<i64: 1, 128>}, {pipeline_mode = #tpu.pipeline_mode<synchronous>, transform_indices = @transform_12, window_bounds = array<i64: 1, 128>}, {transform_indices = @transform_13, window_bounds = array<i64: 8, 128>}, {transform_indices = @transform_14, window_bounds = array<i64: 8, 128>}]} {
    %c0 = arith.constant 0 : index
    %c0_0 = arith.constant 0 : index
    %0 = vector.load %arg1[%c0, %c0_0] : memref<8x64xf32, #tpu.memory_space<vmem>>, vector<8x64xf32>
    %c0_1 = arith.constant 0 : index
    %c0_2 = arith.constant 0 : index
    %1 = vector.load %arg2[%c0_1, %c0_2] : memref<8x64xf32, #tpu.memory_space<vmem>>, vector<8x64xf32>
    %c0_3 = arith.constant 0 : index
    %c0_4 = arith.constant 0 : index
    %2 = vector.load %arg3[%c0_3, %c0_4] : memref<8x64xf32, #tpu.memory_space<vmem>>, vector<8x64xf32>
    %c0_5 = arith.constant 0 : index
    %c0_6 = arith.constant 0 : index
    %3 = vector.load %arg4[%c0_5, %c0_6] : memref<64x128xf32, #tpu.memory_space<vmem>>, vector<64x128xf32>
    %c0_7 = arith.constant 0 : index
    %c0_8 = arith.constant 0 : index
    %4 = vector.load %arg5[%c0_7, %c0_8] : memref<1x128xf32, #tpu.memory_space<vmem>>, vector<1x128xf32>
    %c0_9 = arith.constant 0 : index
    %c0_10 = arith.constant 0 : index
    %5 = vector.load %arg6[%c0_9, %c0_10] : memref<1x128xf32, #tpu.memory_space<vmem>>, vector<1x128xf32>
    %c0_11 = arith.constant 0 : index
    %c0_12 = arith.constant 0 : index
    %6 = vector.load %arg7[%c0_11, %c0_12] : memref<64x128xf32, #tpu.memory_space<vmem>>, vector<64x128xf32>
    %c0_13 = arith.constant 0 : index
    %c0_14 = arith.constant 0 : index
    %7 = vector.load %arg8[%c0_13, %c0_14] : memref<1x128xf32, #tpu.memory_space<vmem>>, vector<1x128xf32>
    %c0_15 = arith.constant 0 : index
    %c0_16 = arith.constant 0 : index
    %8 = vector.load %arg9[%c0_15, %c0_16] : memref<128x128xf32, #tpu.memory_space<vmem>>, vector<128x128xf32>
    %c0_17 = arith.constant 0 : index
    %c0_18 = arith.constant 0 : index
    %9 = vector.load %arg10[%c0_17, %c0_18] : memref<1x128xf32, #tpu.memory_space<vmem>>, vector<1x128xf32>
    %c0_19 = arith.constant 0 : index
    %c0_20 = arith.constant 0 : index
    %10 = vector.load %arg11[%c0_19, %c0_20] : memref<1x128xf32, #tpu.memory_space<vmem>>, vector<1x128xf32>
    %c0_21 = arith.constant 0 : index
    %c0_22 = arith.constant 0 : index
    %11 = vector.load %arg12[%c0_21, %c0_22] : memref<1x128xf32, #tpu.memory_space<vmem>>, vector<1x128xf32>
    %c0_23 = arith.constant 0 : index
    %c0_24 = arith.constant 0 : index
    %12 = vector.load %arg13[%c0_23, %c0_24] : memref<1x128xf32, #tpu.memory_space<vmem>>, vector<1x128xf32>
    %13 = arith.mulf %0, %0 : vector<8x64xf32>
    %14 = arith.mulf %1, %1 : vector<8x64xf32>
    %15 = arith.addf %13, %14 : vector<8x64xf32>
    %cst = arith.constant 9.99999993E-9 : f32
    %16 = vector.broadcast %cst : f32 to vector<8x64xf32>
    %17 = arith.addf %15, %16 : vector<8x64xf32>
    %18 = math.log %17 : vector<8x64xf32>
    %cst_25 = arith.constant 5.000000e-01 : f32
    %19 = vector.broadcast %cst_25 : f32 to vector<8x64xf32>
    %20 = arith.mulf %19, %18 : vector<8x64xf32>
    %cst_26 = arith.constant dense<0.000000e+00> : vector<8x128xf32>
    %21 = tpu.matmul %20, %3, %cst_26 {dimension_numbers = #tpu.dot_dimension_numbers<[1], [0], [0], [1], [0, 0, 1, 1], [], []>} : vector<8x64xf32>, vector<64x128xf32>, vector<8x128xf32> -> vector<8x128xf32>
    %22 = vector.broadcast %4 : vector<1x128xf32> to vector<8x128xf32>
    %23 = arith.addf %21, %22 : vector<8x128xf32>
    %24 = math.exp %23 : vector<8x128xf32>
    %cst_27 = arith.constant dense<0.000000e+00> : vector<8x128xf32>
    %25 = tpu.matmul %2, %3, %cst_27 {dimension_numbers = #tpu.dot_dimension_numbers<[1], [0], [0], [1], [0, 0, 1, 1], [], []>} : vector<8x64xf32>, vector<64x128xf32>, vector<8x128xf32> -> vector<8x128xf32>
    %26 = vector.broadcast %5 : vector<1x128xf32> to vector<8x128xf32>
    %27 = arith.addf %25, %26 : vector<8x128xf32>
    %cst_28 = arith.constant dense<0.000000e+00> : vector<8x128xf32>
    %28 = tpu.matmul %0, %6, %cst_28 {dimension_numbers = #tpu.dot_dimension_numbers<[1], [0], [0], [1], [0, 0, 1, 1], [], []>} : vector<8x64xf32>, vector<64x128xf32>, vector<8x128xf32> -> vector<8x128xf32>
    %29 = vector.broadcast %7 : vector<1x128xf32> to vector<8x128xf32>
    %30 = arith.addf %28, %29 : vector<8x128xf32>
    %cst_29 = arith.constant 0.000000e+00 : f32
    %31 = vector.broadcast %cst_29 : f32 to vector<8x128xf32>
    %32 = arith.maximumf %30, %31 : vector<8x128xf32>
    %cst_30 = arith.constant dense<0.000000e+00> : vector<8x128xf32>
    %33 = tpu.matmul %1, %6, %cst_30 {dimension_numbers = #tpu.dot_dimension_numbers<[1], [0], [0], [1], [0, 0, 1, 1], [], []>} : vector<8x64xf32>, vector<64x128xf32>, vector<8x128xf32> -> vector<8x128xf32>
    %34 = vector.broadcast %7 : vector<1x128xf32> to vector<8x128xf32>
    %35 = arith.addf %33, %34 : vector<8x128xf32>
    %cst_31 = arith.constant 0.000000e+00 : f32
    %36 = vector.broadcast %cst_31 : f32 to vector<8x128xf32>
    %37 = arith.maximumf %35, %36 : vector<8x128xf32>
    %38 = math.cos %27 : vector<8x128xf32>
    %39 = arith.mulf %24, %38 : vector<8x128xf32>
    %40 = arith.addf %32, %39 : vector<8x128xf32>
    %41 = math.sin %27 : vector<8x128xf32>
    %42 = arith.mulf %24, %41 : vector<8x128xf32>
    %43 = arith.addf %37, %42 : vector<8x128xf32>
    %cst_32 = arith.constant dense<0.000000e+00> : vector<8x128xf32>
    %44 = tpu.matmul %40, %8, %cst_32 {dimension_numbers = #tpu.dot_dimension_numbers<[1], [0], [0], [1], [0, 0, 1, 1], [], []>} : vector<8x128xf32>, vector<128x128xf32>, vector<8x128xf32> -> vector<8x128xf32>
    %45 = arith.subf %40, %44 : vector<8x128xf32>
    %46 = arith.mulf %45, %45 : vector<8x128xf32>
    %cst_33 = arith.constant dense<0.000000e+00> : vector<8x128xf32>
    %47 = tpu.matmul %46, %8, %cst_33 {dimension_numbers = #tpu.dot_dimension_numbers<[1], [0], [0], [1], [0, 0, 1, 1], [], []>} : vector<8x128xf32>, vector<128x128xf32>, vector<8x128xf32> -> vector<8x128xf32>
    %cst_34 = arith.constant 9.99999974E-6 : f32
    %48 = vector.broadcast %cst_34 : f32 to vector<8x128xf32>
    %49 = arith.addf %47, %48 : vector<8x128xf32>
    %50 = math.rsqrt %49 : vector<8x128xf32>
    %51 = arith.mulf %45, %50 : vector<8x128xf32>
    %52 = vector.broadcast %9 : vector<1x128xf32> to vector<8x128xf32>
    %53 = arith.mulf %51, %52 : vector<8x128xf32>
    %54 = vector.broadcast %10 : vector<1x128xf32> to vector<8x128xf32>
    %55 = arith.addf %53, %54 : vector<8x128xf32>
    %cst_35 = arith.constant dense<0.000000e+00> : vector<8x128xf32>
    %56 = tpu.matmul %43, %8, %cst_35 {dimension_numbers = #tpu.dot_dimension_numbers<[1], [0], [0], [1], [0, 0, 1, 1], [], []>} : vector<8x128xf32>, vector<128x128xf32>, vector<8x128xf32> -> vector<8x128xf32>
    %57 = arith.subf %43, %56 : vector<8x128xf32>
    %58 = arith.mulf %57, %57 : vector<8x128xf32>
    %cst_36 = arith.constant dense<0.000000e+00> : vector<8x128xf32>
    %59 = tpu.matmul %58, %8, %cst_36 {dimension_numbers = #tpu.dot_dimension_numbers<[1], [0], [0], [1], [0, 0, 1, 1], [], []>} : vector<8x128xf32>, vector<128x128xf32>, vector<8x128xf32> -> vector<8x128xf32>
    %cst_37 = arith.constant 9.99999974E-6 : f32
    %60 = vector.broadcast %cst_37 : f32 to vector<8x128xf32>
    %61 = arith.addf %59, %60 : vector<8x128xf32>
    %62 = math.rsqrt %61 : vector<8x128xf32>
    %63 = arith.mulf %57, %62 : vector<8x128xf32>
    %64 = vector.broadcast %11 : vector<1x128xf32> to vector<8x128xf32>
    %65 = arith.mulf %63, %64 : vector<8x128xf32>
    %66 = vector.broadcast %12 : vector<1x128xf32> to vector<8x128xf32>
    %67 = arith.addf %65, %66 : vector<8x128xf32>
    %c0_38 = arith.constant 0 : index
    %c0_39 = arith.constant 0 : index
    %68 = vector.load %arg14[%c0_38, %c0_39] : memref<8x128xf32, #tpu.memory_space<vmem>>, vector<8x128xf32>
    tpu.vector_store %arg14[%c0_38, %c0_39], %55 {strides = array<i32>} : memref<8x128xf32, #tpu.memory_space<vmem>>, vector<8x128xf32>,
    %c0_40 = arith.constant 0 : index
    %c0_41 = arith.constant 0 : index
    %69 = vector.load %arg15[%c0_40, %c0_41] : memref<8x128xf32, #tpu.memory_space<vmem>>, vector<8x128xf32>
    tpu.vector_store %arg15[%c0_40, %c0_41], %67 {strides = array<i32>} : memref<8x128xf32, #tpu.memory_space<vmem>>, vector<8x128xf32>,
    return
  }
  func.func @transform_0(%arg0: i32) -> (i32, i32) {
    %c0_i32 = arith.constant 0 : i32
    %c0_i32_0 = arith.constant 0 : i32
    return %arg0, %c0_i32 : i32, i32
  }
  func.func @transform_1(%arg0: i32) -> (i32, i32) {
    %c0_i32 = arith.constant 0 : i32
    %c0_i32_0 = arith.constant 0 : i32
    return %arg0, %c0_i32 : i32, i32
  }
  func.func @transform_2(%arg0: i32) -> (i32, i32) {
    %c0_i32 = arith.constant 0 : i32
    %c0_i32_0 = arith.constant 0 : i32
    return %arg0, %c0_i32 : i32, i32
  }
  func.func @transform_3(%arg0: i32) -> (i32, i32) {
    %c0_i32 = arith.constant 0 : i32
    %c0_i32_0 = arith.constant 0 : i32
    %c0_i32_1 = arith.constant 0 : i32
    return %c0_i32, %c0_i32_0 : i32, i32
  }
  func.func @transform_4(%arg0: i32) -> (i32, i32) {
    %c0_i32 = arith.constant 0 : i32
    %c0_i32_0 = arith.constant 0 : i32
    %c0_i32_1 = arith.constant 0 : i32
    return %c0_i32, %c0_i32_0 : i32, i32
  }
  func.func @transform_5(%arg0: i32) -> (i32, i32) {
    %c0_i32 = arith.constant 0 : i32
    %c0_i32_0 = arith.constant 0 : i32
    %c0_i32_1 = arith.constant 0 : i32
    return %c0_i32, %c0_i32_0 : i32, i32
  }
  func.func @transform_6(%arg0: i32) -> (i32, i32) {
    %c0_i32 = arith.constant 0 : i32
    %c0_i32_0 = arith.constant 0 : i32
    %c0_i32_1 = arith.constant 0 : i32
    return %c0_i32, %c0_i32_0 : i32, i32
  }
  func.func @transform_7(%arg0: i32) -> (i32, i32) {
    %c0_i32 = arith.constant 0 : i32
    %c0_i32_0 = arith.constant 0 : i32
    %c0_i32_1 = arith.constant 0 : i32
    return %c0_i32, %c0_i32_0 : i32, i32
  }
  func.func @transform_8(%arg0: i32) -> (i32, i32) {
    %c0_i32 = arith.constant 0 : i32
    %c0_i32_0 = arith.constant 0 : i32
    %c0_i32_1 = arith.constant 0 : i32
    return %c0_i32, %c0_i32_0 : i32, i32
  }
  func.func @transform_9(%arg0: i32) -> (i32, i32) {
    %c0_i32 = arith.constant 0 : i32
    %c0_i32_0 = arith.constant 0 : i32
    %c0_i32_1 = arith.constant 0 : i32
    return %c0_i32, %c0_i32_0 : i32, i32
  }
  func.func @transform_10(%arg0: i32) -> (i32, i32) {
    %c0_i32 = arith.constant 0 : i32
    %c0_i32_0 = arith.constant 0 : i32
    %c0_i32_1 = arith.constant 0 : i32
    return %c0_i32, %c0_i32_0 : i32, i32
  }
  func.func @transform_11(%arg0: i32) -> (i32, i32) {
    %c0_i32 = arith.constant 0 : i32
    %c0_i32_0 = arith.constant 0 : i32
    %c0_i32_1 = arith.constant 0 : i32
    return %c0_i32, %c0_i32_0 : i32, i32
  }
  func.func @transform_12(%arg0: i32) -> (i32, i32) {
    %c0_i32 = arith.constant 0 : i32
    %c0_i32_0 = arith.constant 0 : i32
    %c0_i32_1 = arith.constant 0 : i32
    return %c0_i32, %c0_i32_0 : i32, i32
  }
  func.func @transform_13(%arg0: i32) -> (i32, i32) {
    %c0_i32 = arith.constant 0 : i32
    %c0_i32_0 = arith.constant 0 : i32
    return %arg0, %c0_i32 : i32, i32
  }
  func.func @transform_14(%arg0: i32) -> (i32, i32) {
    %c0_i32 = arith.constant 0 : i32
    %c0_i32_0 = arith.constant 0 : i32
    return %arg0, %c0_i32 : i32, i32
  }
}

</mosaic_0001>

<llo_original>
// kernel: tpu_custom_call.1
$region0: #{tpu_custom_call.1}
  #allocation0 [shape = 'u32[]', space=smem, size = 0x4, offset = 0x4, fixed_abs, tag = 'smem constant byte address 0x4 - core index']
  #allocation1 [shape = 'u32[144,128]{1,0:T(1,128)}', space=vmem, size = 0x12000, scoped, tag = 'internal scratch']
  %s0 = inlined_call_operand.hbm [shape: f32[8,64], index: 0, kind: input, shape index: {}]
  %s1 = inlined_call_operand.hbm [shape: f32[8,64], index: 1, kind: input, shape index: {}]
  %s2 = inlined_call_operand.hbm [shape: f32[8,64], index: 2, kind: input, shape index: {}]
  %s3 = inlined_call_operand.hbm [shape: f32[64,128], index: 3, kind: input, shape index: {}]
  %s4 = inlined_call_operand.vmem [shape: f32[1,128], index: 4, kind: input, shape index: {}]
  %s5 = inlined_call_operand.vmem [shape: f32[1,128], index: 5, kind: input, shape index: {}]
  %s6 = inlined_call_operand.hbm [shape: f32[64,128], index: 6, kind: input, shape index: {}]
  %s7 = inlined_call_operand.vmem [shape: f32[1,128], index: 7, kind: input, shape index: {}]
  %s8 = inlined_call_operand.hbm [shape: f32[128,128], index: 8, kind: input, shape index: {}]
  %s9 = inlined_call_operand.vmem [shape: f32[1,128], index: 9, kind: input, shape index: {}]
  %s10 = inlined_call_operand.vmem [shape: f32[1,128], index: 10, kind: input, shape index: {}]
  %s11 = inlined_call_operand.vmem [shape: f32[1,128], index: 11, kind: input, shape index: {}]
  %s12 = inlined_call_operand.vmem [shape: f32[1,128], index: 12, kind: input, shape index: {}]
  %s13 = inlined_call_operand.hbm [shape: f32[8,128], index: 13, kind: output, shape index: {0}]
  %s14 = inlined_call_operand.hbm [shape: f32[8,128], index: 14, kind: output, shape index: {1}]
  %15 = xla_tuple %s13, %s14
  %s16 = sld [smem:[#allocation0]]
  $region94: #{tpu_custom_call.1} parent=0
    _
  %s18 = ssub.s32 1, %s16
  %s19 = scalar_select 0, %s18, %s16
  $region1: #{tpu_custom_call.1} parent=0
    #allocation2 [shape = 'u8[4096]{0}', space=vmem, size = 0x1000, scoped, tag = 'input window, operand 0, single buffered']
    #allocation3 [shape = 's32[1]{0}', space=sflag, size = 0x4, scoped, tag = 'scoped memory for tpu_custom_call.1']
    #allocation4 [shape = 's32[1]{0}', space=sflag, size = 0x4, scoped, tag = 'scoped memory for tpu_custom_call.1']
    #allocation5 [shape = 'u8[4096]{0}', space=vmem, size = 0x1000, scoped, tag = 'input window, operand 1, single buffered']
    #allocation6 [shape = 's32[1]{0}', space=sflag, size = 0x4, scoped, tag = 'scoped memory for tpu_custom_call.1']
    #allocation7 [shape = 'u8[4096]{0}', space=vmem, size = 0x1000, scoped, tag = 'input window, operand 2, single buffered']
    #allocation8 [shape = 'u8[32768]{0}', space=vmem, size = 0x8000, scoped, tag = 'input window, operand 3, single buffered']
    #allocation9 [shape = 's32[1]{0}', space=sflag, size = 0x4, scoped, tag = 'scoped memory for tpu_custom_call.1']
    #allocation10 [shape = 'u8[32768]{0}', space=vmem, size = 0x8000, scoped, tag = 'input window, operand 6, single buffered']
    #allocation11 [shape = 'u8[65536]{0}', space=vmem, size = 0x10000, scoped, tag = 'input window, operand 8, single buffered']
    #allocation12 [shape = 's32[1]{0}', space=sflag, size = 0x4, scoped, tag = 'scoped memory for tpu_custom_call.1']
    #allocation13 [shape = 'u8[4096]{0}', space=vmem, size = 0x1000, scoped, tag = 'output window, operand 0, single buffered']
    #allocation14 [shape = 'u8[4096]{0}', space=vmem, size = 0x1000, scoped, tag = 'output window, operand 1, single buffered']
    #allocation15 [shape = 's32[1]{0}', space=sflag, size = 0x4, scoped, tag = 'scoped memory for tpu_custom_call.1']
    %20 = vsyncpa [#allocation3], 0
    %21 = vsyncpa [#allocation6], 0
    %22 = vsyncpa [#allocation9], 0
    %23 = vsyncpa [#allocation12], 0
    %24 = vsyncpa [#allocation4], 0
    %25 = vsyncpa [#allocation15], 0
    // Predicated region
    $region2: #{tpu_custom_call.1} parent=1 // pred_check
      _
    $region3: #{tpu_custom_call.1} parent=1 // pred_check_branch
      %27 = sbr.rel (0) target = $region5
    $region4: #{tpu_custom_call.1} parent=1 // pred_region
      %s29 = ssub.s32 128, 128
      %30 = vsyncadd [#allocation3], %s29
      %s32 = sshll.u32 [#allocation2], 4
      %s33 = int_to_ptr.vmem [resolvable:$true] %s32
      %35 = dma.hbm_to_vmem [thread:$0]  %s0, 128, %s33, [#allocation3]
    $region5: #{tpu_custom_call.1} parent=1 // pred_fallthru
      _
    // Predicated region
    $region6: #{tpu_custom_call.1} parent=1 // pred_check
      _
    $region7: #{tpu_custom_call.1} parent=1 // pred_check_branch
      %37 = sbr.rel (0) target = $region9
    $region8: #{tpu_custom_call.1} parent=1 // pred_region
      %s39 = ssub.s32 128, 128
      %40 = vsyncadd [#allocation6], %s39
      %s42 = sshll.u32 [#allocation5], 4
      %s43 = int_to_ptr.vmem [resolvable:$true] %s42
      %45 = dma.hbm_to_vmem [thread:$0]  %s1, 128, %s43, [#allocation6]
    $region9: #{tpu_custom_call.1} parent=1 // pred_fallthru
      _
    // Predicated region
    $region10: #{tpu_custom_call.1} parent=1 // pred_check
      _
    $region11: #{tpu_custom_call.1} parent=1 // pred_check_branch
      %47 = sbr.rel (0) target = $region13
    $region12: #{tpu_custom_call.1} parent=1 // pred_region
      %s49 = ssub.s32 128, 128
      %50 = vsyncadd [#allocation6], %s49
      %s52 = sshll.u32 [#allocation7], 4
      %s53 = int_to_ptr.vmem [resolvable:$true] %s52
      %55 = dma.hbm_to_vmem [thread:$0]  %s2, 128, %s53, [#allocation6]
    $region13: #{tpu_custom_call.1} parent=1 // pred_fallthru
      _
    // Predicated region
    $region14: #{tpu_custom_call.1} parent=1 // pred_check
      _
    $region15: #{tpu_custom_call.1} parent=1 // pred_check_branch
      %57 = sbr.rel (0) target = $region17
    $region16: #{tpu_custom_call.1} parent=1 // pred_region
      %s59 = ssub.s32 1024, 1024
      %60 = vsyncadd [#allocation9], %s59
      %s61 = sshll.u32 [#allocation8], 4
      %s62 = int_to_ptr.vmem [resolvable:$true] %s61
      %67 = dma.hbm_to_vmem [thread:$0]  %s3, 1024, %s62, [#allocation9], 128, 128, 8
    $region17: #{tpu_custom_call.1} parent=1 // pred_fallthru
      _
    // Predicated region
    $region18: #{tpu_custom_call.1} parent=1 // pred_check
      _
    $region19: #{tpu_custom_call.1} parent=1 // pred_check_branch
      %69 = sbr.rel (0) target = $region21
    $region20: #{tpu_custom_call.1} parent=1 // pred_region
      _
    $region21: #{tpu_custom_call.1} parent=1 // pred_fallthru
      _
    // Predicated region
    $region22: #{tpu_custom_call.1} parent=1 // pred_check
      _
    $region23: #{tpu_custom_call.1} parent=1 // pred_check_branch
      %71 = sbr.rel (0) target = $region25
    $region24: #{tpu_custom_call.1} parent=1 // pred_region
      _
    $region25: #{tpu_custom_call.1} parent=1 // pred_fallthru
      _
    // Predicated region
    $region26: #{tpu_custom_call.1} parent=1 // pred_check
      _
    $region27: #{tpu_custom_call.1} parent=1 // pred_check_branch
      %73 = sbr.rel (0) target = $region29
    $region28: #{tpu_custom_call.1} parent=1 // pred_region
      %s75 = ssub.s32 1024, 1024
      %76 = vsyncadd [#allocation9], %s75
      %s77 = sshll.u32 [#allocation10], 4
      %s78 = int_to_ptr.vmem [resolvable:$true] %s77
      %83 = dma.hbm_to_vmem [thread:$0]  %s6, 1024, %s78, [#allocation9], 128, 128, 8
    $region29: #{tpu_custom_call.1} parent=1 // pred_fallthru
      _
    // Predicated region
    $region30: #{tpu_custom_call.1} parent=1 // pred_check
      _
    $region31: #{tpu_custom_call.1} parent=1 // pred_check_branch
      %85 = sbr.rel (0) target = $region33
    $region32: #{tpu_custom_call.1} parent=1 // pred_region
      _
    $region33: #{tpu_custom_call.1} parent=1 // pred_fallthru
      _
    // Predicated region
    $region34: #{tpu_custom_call.1} parent=1 // pred_check
      _
    $region35: #{tpu_custom_call.1} parent=1 // pred_check_branch
      %87 = sbr.rel (0) target = $region37
    $region36: #{tpu_custom_call.1} parent=1 // pred_region
      %s89 = ssub.s32 2048, 2048
      %90 = vsyncadd [#allocation12], %s89
      %s91 = sshll.u32 [#allocation11], 4
      %s92 = int_to_ptr.vmem [resolvable:$true] %s91
      %97 = dma.hbm_to_vmem [thread:$0]  %s8, 2048, %s92, [#allocation12], 128, 128, 8
    $region37: #{tpu_custom_call.1} parent=1 // pred_fallthru
      _
    // Predicated region
    $region38: #{tpu_custom_call.1} parent=1 // pred_check
      _
    $region39: #{tpu_custom_call.1} parent=1 // pred_check_branch
      %99 = sbr.rel (0) target = $region41
    $region40: #{tpu_custom_call.1} parent=1 // pred_region
      _
    $region41: #{tpu_custom_call.1} parent=1 // pred_fallthru
      _
    // Predicated region
    $region42: #{tpu_custom_call.1} parent=1 // pred_check
      _
    $region43: #{tpu_custom_call.1} parent=1 // pred_check_branch
      %101 = sbr.rel (0) target = $region45
    $region44: #{tpu_custom_call.1} parent=1 // pred_region
      _
    $region45: #{tpu_custom_call.1} parent=1 // pred_fallthru
      _
    // Predicated region
    $region46: #{tpu_custom_call.1} parent=1 // pred_check
      _
    $region47: #{tpu_custom_call.1} parent=1 // pred_check_branch
      %103 = sbr.rel (0) target = $region49
    $region48: #{tpu_custom_call.1} parent=1 // pred_region
      _
    $region49: #{tpu_custom_call.1} parent=1 // pred_fallthru
      _
    // Predicated region
    $region50: #{tpu_custom_call.1} parent=1 // pred_check
      _
    $region51: #{tpu_custom_call.1} parent=1 // pred_check_branch
      %105 = sbr.rel (0) target = $region53
    $region52: #{tpu_custom_call.1} parent=1 // pred_region
      _
    $region53: #{tpu_custom_call.1} parent=1 // pred_fallthru
      _
    // Predicated region
    $region54: #{tpu_custom_call.1} parent=1 // pred_check
      _
    $region55: #{tpu_custom_call.1} parent=1 // pred_check_branch
      %107 = sbr.rel (0) target = $region57
    $region56: #{tpu_custom_call.1} parent=1 // pred_region
      %108 = dma.done [#allocation3], 128
    $region57: #{tpu_custom_call.1} parent=1 // pred_fallthru
      _
    // Predicated region
    $region58: #{tpu_custom_call.1} parent=1 // pred_check
      _
    $region59: #{tpu_custom_call.1} parent=1 // pred_check_branch
      %110 = sbr.rel (0) target = $region61
    $region60: #{tpu_custom_call.1} parent=1 // pred_region
      %111 = dma.done [#allocation6], 128
    $region61: #{tpu_custom_call.1} parent=1 // pred_fallthru
      _
    // Predicated region
    $region62: #{tpu_custom_call.1} parent=1 // pred_check
      _
    $region63: #{tpu_custom_call.1} parent=1 // pred_check_branch
      %113 = sbr.rel (0) target = $region65
    $region64: #{tpu_custom_call.1} parent=1 // pred_region
      %114 = dma.done [#allocation6], 128
    $region65: #{tpu_custom_call.1} parent=1 // pred_fallthru
      _
    // Predicated region
    $region66: #{tpu_custom_call.1} parent=1 // pred_check
      _
    $region67: #{tpu_custom_call.1} parent=1 // pred_check_branch
      %116 = sbr.rel (0) target = $region69
    $region68: #{tpu_custom_call.1} parent=1 // pred_region
      %117 = dma.done [#allocation9], 1024
    $region69: #{tpu_custom_call.1} parent=1 // pred_fallthru
      _
    // Predicated region
    $region70: #{tpu_custom_call.1} parent=1 // pred_check
      _
    $region71: #{tpu_custom_call.1} parent=1 // pred_check_branch
      %119 = sbr.rel (0) target = $region73
    $region72: #{tpu_custom_call.1} parent=1 // pred_region
      %120 = dma.done [#allocation9], 1024
    $region73: #{tpu_custom_call.1} parent=1 // pred_fallthru
      _
    // Predicated region
    $region74: #{tpu_custom_call.1} parent=1 // pred_check
      _
    $region75: #{tpu_custom_call.1} parent=1 // pred_check_branch
      %122 = sbr.rel (0) target = $region77
    $region76: #{tpu_custom_call.1} parent=1 // pred_region
      %123 = dma.done [#allocation12], 2048
    $region77: #{tpu_custom_call.1} parent=1 // pred_fallthru
      _
    %v124 = vld [vmem:[#allocation2] sm:$0xff]
    %v125 = vld [vmem:[#allocation5] sm:$0xff]
    %v126 = vld [vmem:[#allocation7] sm:$0xff]
    %v127 = vld [vmem:[#allocation8] sm:$0xff]
    %v128 = vld [vmem:[#allocation8 + $0x8] sm:$0xff]
    %v129 = vld [vmem:[#allocation8 + $0x10] sm:$0xff]
    %v130 = vld [vmem:[#allocation8 + $0x18] sm:$0xff]
    %v131 = vld [vmem:[#allocation8 + $0x20] sm:$0xff]
    %v132 = vld [vmem:[#allocation8 + $0x28] sm:$0xff]
    %v133 = vld [vmem:[#allocation8 + $0x30] sm:$0xff]
    %v134 = vld [vmem:[#allocation8 + $0x38] sm:$0xff]
    %v135 = vld [vmem:[%s4] sm:$0x1]
    %v136 = vld [vmem:[%s5] sm:$0x1]
    %v137 = vld [vmem:[#allocation10] sm:$0xff]
    %v138 = vld [vmem:[#allocation10 + $0x8] sm:$0xff]
    %v139 = vld [vmem:[#allocation10 + $0x10] sm:$0xff]
    %v140 = vld [vmem:[#allocation10 + $0x18] sm:$0xff]
    %v141 = vld [vmem:[#allocation10 + $0x20] sm:$0xff]
    %v142 = vld [vmem:[#allocation10 + $0x28] sm:$0xff]
    %v143 = vld [vmem:[#allocation10 + $0x30] sm:$0xff]
    %v144 = vld [vmem:[#allocation10 + $0x38] sm:$0xff]
    %v145 = vld [vmem:[%s7] sm:$0x1]
    %v146 = vld [vmem:[#allocation11] sm:$0xff]
    %v147 = vld [vmem:[#allocation11 + $0x8] sm:$0xff]
    %v148 = vld [vmem:[#allocation11 + $0x10] sm:$0xff]
    %v149 = vld [vmem:[#allocation11 + $0x18] sm:$0xff]
    %v150 = vld [vmem:[#allocation11 + $0x20] sm:$0xff]
    %v151 = vld [vmem:[#allocation11 + $0x28] sm:$0xff]
    %v152 = vld [vmem:[#allocation11 + $0x30] sm:$0xff]
    %v153 = vld [vmem:[#allocation11 + $0x38] sm:$0xff]
    %v154 = vld [vmem:[#allocation11 + $0x40] sm:$0xff]
    %v155 = vld [vmem:[#allocation11 + $0x48] sm:$0xff]
    %v156 = vld [vmem:[#allocation11 + $0x50] sm:$0xff]
    %v157 = vld [vmem:[#allocation11 + $0x58] sm:$0xff]
    %v158 = vld [vmem:[#allocation11 + $0x60] sm:$0xff]
    %v159 = vld [vmem:[#allocation11 + $0x68] sm:$0xff]
    %v160 = vld [vmem:[#allocation11 + $0x70] sm:$0xff]
    %v161 = vld [vmem:[#allocation11 + $0x78] sm:$0xff]
    %v162 = vld [vmem:[%s9] sm:$0x1]
    %v163 = vld [vmem:[%s10] sm:$0x1]
    %v164 = vld [vmem:[%s11] sm:$0x1]
    %v165 = vld [vmem:[%s12] sm:$0x1]
    %v166 = vmul.f32 %v124, %v124
    %v167 = vmul.f32 %v125, %v125
    %v168 = vadd.f32 %v166, %v167
    %v169 = vadd.f32 %v168, 1e-08
    %v170 = vlog2.pop %v169
    %v171 = vmul.f32 %v170, 0.6931472
    %v172 = vmul.f32 %v171, 0.5
    %v174 = vlaneseq
    %v175 = vshrl.u32 %v174, 7
    %v176 = vsub.s32 0, %v175
    %v177 = vrot.slane %v135, %v176
    %vm179 = vcmask 523264
    %v181 = vsel %vm179, %v172, 0
    %183 = vmatprep.subr.mxu0 0.0
    %184 = vmatpush1.msra.mxu0 %v127
    %185 = vmatprep.subr.mxu0 0.0
    %186 = vmatpush1.msra.mxu0 %v128
    %187 = vmatprep.subr.mxu0 0.0
    %188 = vmatpush1.msra.mxu0 %v129
    %189 = vmatprep.subr.mxu0 0.0
    %190 = vmatpush1.msra.mxu0 %v130
    %191 = vmatprep.subr.mxu0 0.0
    %192 = vmatpush1.msra.mxu0 %v131
    %193 = vmatprep.subr.mxu0 0.0
    %194 = vmatpush1.msra.mxu0 %v132
    %195 = vmatprep.subr.mxu0 0.0
    %196 = vmatpush1.msra.mxu0 %v133
    %197 = vmatprep.subr.mxu0 0.0
    %198 = vmatpush1.msra.mxu0 %v134
    %199 = vmatprep.subr.mxu0 0.0
    %200 = vmatpush1.msra.mxu0 0.0
    %201 = vmatprep.subr.mxu0 0.0
    %202 = vmatpush1.msra.mxu0 0.0
    %203 = vmatprep.subr.mxu0 0.0
    %204 = vmatpush1.msra.mxu0 0.0
    %205 = vmatprep.subr.mxu0 0.0
    %206 = vmatpush1.msra.mxu0 0.0
    %207 = vmatprep.subr.mxu0 0.0
    %208 = vmatpush1.msra.mxu0 0.0
    %209 = vmatprep.subr.mxu0 0.0
    %210 = vmatpush1.msra.mxu0 0.0
    %211 = vmatprep.subr.mxu0 0.0
    %212 = vmatpush1.msra.mxu0 0.0
    %213 = vmatprep.subr.mxu0 0.0
    %214 = vmatpush1.msra.mxu0 0.0
    %215 = vmatprep.subr.mxu0 0.0
    %216 = vmatpush1.msra.mxu0 0.0
    %217 = vmatprep.subr.mxu0 0.0
    %218 = vmatpush1.msra.mxu0 0.0
    %219 = vmatprep.subr.mxu0 0.0
    %220 = vmatpush1.msra.mxu0 0.0
    %221 = vmatprep.subr.mxu0 0.0
    %222 = vmatpush1.msra.mxu0 0.0
    %223 = vmatprep.subr.mxu0 0.0
    %224 = vmatpush1.msra.mxu0 0.0
    %225 = vmatprep.subr.mxu0 0.0
    %226 = vmatpush1.msra.mxu0 0.0
    %227 = vmatprep.subr.mxu0 0.0
    %228 = vmatpush1.msra.mxu0 0.0
    %229 = vmatprep.subr.mxu0 0.0
    %230 = vmatpush1.msra.mxu0 0.0
    %231 = vmatprep.subr.mxu0 0.0
    %232 = vmatpush1.msra.mxu0 0.0
    %233 = vmatprep.subr.mxu0 0.0
    %234 = vmatpush1.msra.mxu0 0.0
    %235 = vmatprep.subr.mxu0 0.0
    %236 = vmatpush1.msra.mxu0 0.0
    %237 = vmatprep.subr.mxu0 0.0
    %238 = vmatpush1.msra.mxu0 0.0
    %239 = vmatprep.subr.mxu0 0.0
    %240 = vmatpush1.msra.mxu0 0.0
    %241 = vmatprep.subr.mxu0 0.0
    %242 = vmatpush1.msra.mxu0 0.0
    %243 = vmatprep.subr.mxu0 0.0
    %244 = vmatpush1.msra.mxu0 0.0
    %245 = vmatprep.subr.mxu0 0.0
    %246 = vmatpush1.msra.mxu0 0.0
    %247 = vmatprep.mubr.f32.mxu0 0.0
    %248 = vmatmul.mubr.f32.gmra.mrb[0].mxu0 %v181
    %v249 = vpop.f32.mrb[0].mxu0
    %v250 = vadd.f32 %v177, %v249
    %v251 = vpop.f32.mrb[0].mxu0
    %252 = vdwg.mxu0
    %v253 = vmul.f32 %v250, 1.442695
    %v254 = vpow.pop %v253
    %v256 = vlaneseq
    %v257 = vshrl.u32 %v256, 7
    %v258 = vsub.s32 0, %v257
    %v259 = vrot.slane %v136, %v258
    %v262 = vsel %vm179, %v126, 0
    %264 = vmatprep.subr.mxu0 0.0
    %265 = vmatpush1.msra.mxu0 %v127
    %266 = vmatprep.subr.mxu0 0.0
    %267 = vmatpush1.msra.mxu0 %v128
    %268 = vmatprep.subr.mxu0 0.0
    %269 = vmatpush1.msra.mxu0 %v129
    %270 = vmatprep.subr.mxu0 0.0
    %271 = vmatpush1.msra.mxu0 %v130
    %272 = vmatprep.subr.mxu0 0.0
    %273 = vmatpush1.msra.mxu0 %v131
    %274 = vmatprep.subr.mxu0 0.0
    %275 = vmatpush1.msra.mxu0 %v132
    %276 = vmatprep.subr.mxu0 0.0
    %277 = vmatpush1.msra.mxu0 %v133
    %278 = vmatprep.subr.mxu0 0.0
    %279 = vmatpush1.msra.mxu0 %v134
    %280 = vmatprep.subr.mxu0 0.0
    %281 = vmatpush1.msra.mxu0 0.0
    %282 = vmatprep.subr.mxu0 0.0
    %283 = vmatpush1.msra.mxu0 0.0
    %284 = vmatprep.subr.mxu0 0.0
    %285 = vmatpush1.msra.mxu0 0.0
    %286 = vmatprep.subr.mxu0 0.0
    %287 = vmatpush1.msra.mxu0 0.0
    %288 = vmatprep.subr.mxu0 0.0
    %289 = vmatpush1.msra.mxu0 0.0
    %290 = vmatprep.subr.mxu0 0.0
    %291 = vmatpush1.msra.mxu0 0.0
    %292 = vmatprep.subr.mxu0 0.0
    %293 = vmatpush1.msra.mxu0 0.0
    %294 = vmatprep.subr.mxu0 0.0
    %295 = vmatpush1.msra.mxu0 0.0
    %296 = vmatprep.subr.mxu0 0.0
    %297 = vmatpush1.msra.mxu0 0.0
    %298 = vmatprep.subr.mxu0 0.0
    %299 = vmatpush1.msra.mxu0 0.0
    %300 = vmatprep.subr.mxu0 0.0
    %301 = vmatpush1.msra.mxu0 0.0
    %302 = vmatprep.subr.mxu0 0.0
    %303 = vmatpush1.msra.mxu0 0.0
    %304 = vmatprep.subr.mxu0 0.0
    %305 = vmatpush1.msra.mxu0 0.0
    %306 = vmatprep.subr.mxu0 0.0
    %307 = vmatpush1.msra.mxu0 0.0
    %308 = vmatprep.subr.mxu0 0.0
    %309 = vmatpush1.msra.mxu0 0.0
    %310 = vmatprep.subr.mxu0 0.0
    %311 = vmatpush1.msra.mxu0 0.0
    %312 = vmatprep.subr.mxu0 0.0
    %313 = vmatpush1.msra.mxu0 0.0
    %314 = vmatprep.subr.mxu0 0.0
    %315 = vmatpush1.msra.mxu0 0.0
    %316 = vmatprep.subr.mxu0 0.0
    %317 = vmatpush1.msra.mxu0 0.0
    %318 = vmatprep.subr.mxu0 0.0
    %319 = vmatpush1.msra.mxu0 0.0
    %320 = vmatprep.subr.mxu0 0.0
    %321 = vmatpush1.msra.mxu0 0.0
    %322 = vmatprep.subr.mxu0 0.0
    %323 = vmatpush1.msra.mxu0 0.0
    %324 = vmatprep.subr.mxu0 0.0
    %325 = vmatpush1.msra.mxu0 0.0
    %326 = vmatprep.subr.mxu0 0.0
    %327 = vmatpush1.msra.mxu0 0.0
    %328 = vmatprep.mubr.f32.mxu0 0.0
    %329 = vmatmul.mubr.f32.gmra.mrb[0].mxu0 %v262
    %v330 = vpop.f32.mrb[0].mxu0
    %v331 = vadd.f32 %v259, %v330
    %v332 = vpop.f32.mrb[0].mxu0
    %333 = vdwg.mxu0
    %v335 = vlaneseq
    %v336 = vshrl.u32 %v335, 7
    %v337 = vsub.s32 0, %v336
    %v338 = vrot.slane %v145, %v337
    %v341 = vsel %vm179, %v124, 0
    %343 = vmatprep.subr.mxu0 0.0
    %344 = vmatpush1.msra.mxu0 %v137
    %345 = vmatprep.subr.mxu0 0.0
    %346 = vmatpush1.msra.mxu0 %v138
    %347 = vmatprep.subr.mxu0 0.0
    %348 = vmatpush1.msra.mxu0 %v139
    %349 = vmatprep.subr.mxu0 0.0
    %350 = vmatpush1.msra.mxu0 %v140
    %351 = vmatprep.subr.mxu0 0.0
    %352 = vmatpush1.msra.mxu0 %v141
    %353 = vmatprep.subr.mxu0 0.0
    %354 = vmatpush1.msra.mxu0 %v142
    %355 = vmatprep.subr.mxu0 0.0
    %356 = vmatpush1.msra.mxu0 %v143
    %357 = vmatprep.subr.mxu0 0.0
    %358 = vmatpush1.msra.mxu0 %v144
    %359 = vmatprep.subr.mxu0 0.0
    %360 = vmatpush1.msra.mxu0 0.0
    %361 = vmatprep.subr.mxu0 0.0
    %362 = vmatpush1.msra.mxu0 0.0
    %363 = vmatprep.subr.mxu0 0.0
    %364 = vmatpush1.msra.mxu0 0.0
    %365 = vmatprep.subr.mxu0 0.0
    %366 = vmatpush1.msra.mxu0 0.0
    %367 = vmatprep.subr.mxu0 0.0
    %368 = vmatpush1.msra.mxu0 0.0
    %369 = vmatprep.subr.mxu0 0.0
    %370 = vmatpush1.msra.mxu0 0.0
    %371 = vmatprep.subr.mxu0 0.0
    %372 = vmatpush1.msra.mxu0 0.0
    %373 = vmatprep.subr.mxu0 0.0
    %374 = vmatpush1.msra.mxu0 0.0
    %375 = vmatprep.subr.mxu0 0.0
    %376 = vmatpush1.msra.mxu0 0.0
    %377 = vmatprep.subr.mxu0 0.0
    %378 = vmatpush1.msra.mxu0 0.0
    %379 = vmatprep.subr.mxu0 0.0
    %380 = vmatpush1.msra.mxu0 0.0
    %381 = vmatprep.subr.mxu0 0.0
    %382 = vmatpush1.msra.mxu0 0.0
    %383 = vmatprep.subr.mxu0 0.0
    %384 = vmatpush1.msra.mxu0 0.0
    %385 = vmatprep.subr.mxu0 0.0
    %386 = vmatpush1.msra.mxu0 0.0
    %387 = vmatprep.subr.mxu0 0.0
    %388 = vmatpush1.msra.mxu0 0.0
    %389 = vmatprep.subr.mxu0 0.0
    %390 = vmatpush1.msra.mxu0 0.0
    %391 = vmatprep.subr.mxu0 0.0
    %392 = vmatpush1.msra.mxu0 0.0
    %393 = vmatprep.subr.mxu0 0.0
    %394 = vmatpush1.msra.mxu0 0.0
    %395 = vmatprep.subr.mxu0 0.0
    %396 = vmatpush1.msra.mxu0 0.0
    %397 = vmatprep.subr.mxu0 0.0
    %398 = vmatpush1.msra.mxu0 0.0
    %399 = vmatprep.subr.mxu0 0.0
    %400 = vmatpush1.msra.mxu0 0.0
    %401 = vmatprep.subr.mxu0 0.0
    %402 = vmatpush1.msra.mxu0 0.0
    %403 = vmatprep.subr.mxu0 0.0
    %404 = vmatpush1.msra.mxu0 0.0
    %405 = vmatprep.subr.mxu0 0.0
    %406 = vmatpush1.msra.mxu0 0.0
    %407 = vmatprep.mubr.f32.mxu0 0.0
    %408 = vmatmul.mubr.f32.gmra.mrb[0].mxu0 %v341
    %v409 = vpop.f32.mrb[0].mxu0
    %v410 = vadd.f32 %v338, %v409
    %v411 = vpop.f32.mrb[0].mxu0
    %412 = vdwg.mxu0
    %v413 = vmax.f32 %v410, 0.0
    %v415 = vsel %vm179, %v125, 0
    %417 = vmatprep.subr.mxu0 0.0
    %418 = vmatpush1.msra.mxu0 %v137
    %419 = vmatprep.subr.mxu0 0.0
    %420 = vmatpush1.msra.mxu0 %v138
    %421 = vmatprep.subr.mxu0 0.0
    %422 = vmatpush1.msra.mxu0 %v139
    %423 = vmatprep.subr.mxu0 0.0
    %424 = vmatpush1.msra.mxu0 %v140
    %425 = vmatprep.subr.mxu0 0.0
    %426 = vmatpush1.msra.mxu0 %v141
    %427 = vmatprep.subr.mxu0 0.0
    %428 = vmatpush1.msra.mxu0 %v142
    %429 = vmatprep.subr.mxu0 0.0
    %430 = vmatpush1.msra.mxu0 %v143
    %431 = vmatprep.subr.mxu0 0.0
    %432 = vmatpush1.msra.mxu0 %v144
    %433 = vmatprep.subr.mxu0 0.0
    %434 = vmatpush1.msra.mxu0 0.0
    %435 = vmatprep.subr.mxu0 0.0
    %436 = vmatpush1.msra.mxu0 0.0
    %437 = vmatprep.subr.mxu0 0.0
    %438 = vmatpush1.msra.mxu0 0.0
    %439 = vmatprep.subr.mxu0 0.0
    %440 = vmatpush1.msra.mxu0 0.0
    %441 = vmatprep.subr.mxu0 0.0
    %442 = vmatpush1.msra.mxu0 0.0
    %443 = vmatprep.subr.mxu0 0.0
    %444 = vmatpush1.msra.mxu0 0.0
    %445 = vmatprep.subr.mxu0 0.0
    %446 = vmatpush1.msra.mxu0 0.0
    %447 = vmatprep.subr.mxu0 0.0
    %448 = vmatpush1.msra.mxu0 0.0
    %449 = vmatprep.subr.mxu0 0.0
    %450 = vmatpush1.msra.mxu0 0.0
    %451 = vmatprep.subr.mxu0 0.0
    %452 = vmatpush1.msra.mxu0 0.0
    %453 = vmatprep.subr.mxu0 0.0
    %454 = vmatpush1.msra.mxu0 0.0
    %455 = vmatprep.subr.mxu0 0.0
    %456 = vmatpush1.msra.mxu0 0.0
    %457 = vmatprep.subr.mxu0 0.0
    %458 = vmatpush1.msra.mxu0 0.0
    %459 = vmatprep.subr.mxu0 0.0
    %460 = vmatpush1.msra.mxu0 0.0
    %461 = vmatprep.subr.mxu0 0.0
    %462 = vmatpush1.msra.mxu0 0.0
    %463 = vmatprep.subr.mxu0 0.0
    %464 = vmatpush1.msra.mxu0 0.0
    %465 = vmatprep.subr.mxu0 0.0
    %466 = vmatpush1.msra.mxu0 0.0
    %467 = vmatprep.subr.mxu0 0.0
    %468 = vmatpush1.msra.mxu0 0.0
    %469 = vmatprep.subr.mxu0 0.0
    %470 = vmatpush1.msra.mxu0 0.0
    %471 = vmatprep.subr.mxu0 0.0
    %472 = vmatpush1.msra.mxu0 0.0
    %473 = vmatprep.subr.mxu0 0.0
    %474 = vmatpush1.msra.mxu0 0.0
    %475 = vmatprep.subr.mxu0 0.0
    %476 = vmatpush1.msra.mxu0 0.0
    %477 = vmatprep.subr.mxu0 0.0
    %478 = vmatpush1.msra.mxu0 0.0
    %479 = vmatprep.subr.mxu0 0.0
    %480 = vmatpush1.msra.mxu0 0.0
    %481 = vmatprep.mubr.f32.mxu0 0.0
    %482 = vmatmul.mubr.f32.gmra.mrb[0].mxu0 %v415
    %v483 = vpop.f32.mrb[0].mxu0
    %v484 = vadd.f32 %v338, %v483
    %v485 = vpop.f32.mrb[0].mxu0
    %486 = vdwg.mxu0
    %v487 = vmax.f32 %v484, 0.0
    %v488 = vand.u32 2147483647, %v331
    %vm489 = vcmp.le.f32.partialorder %v488, 0.7853982
    %vm490 = vcmp.lt.s32.totalorder %v331, 0
    %v491 = vand.u32 %v331, 2139095040
    %v492 = vshrl.u32 %v491, 23
    %v493 = vsub.s32 %v492, 127
    %v494 = vand.u32 2147483647, %v331
    %v495 = vand.u32 %v494, 8388607
    %v496 = vor.u32 %v495, 8388608
    %v497 = vsub.s32 0, %v496
    %v498 = vadd.s32 %v493, 1
    %vm499 = vcmp.gt.s32.totalorder %v498, 0
    %v500 = vsel %vm499, %v498, 0
    %v501 = vshrl.u32 %v500, 5
    %v502 = vand.u32 %v500, 31
    %v503 = vsub.s32 32, %v502
    %v504 = vshrl.u32 683565275, %v503
    %v505 = vshll.u32 683565275, %v502
    %v506 = vshrl.u32 2475754826, %v503
    %v507 = vor.u32 %v505, %v506
    %v508 = vshll.u32 2475754826, %v502
    %v509 = vshrl.u32 2131351028, %v503
    %v510 = vor.u32 %v508, %v509
    %v511 = vshll.u32 2131351028, %v502
    %v512 = vshrl.u32 2102212464, %v503
    %v513 = vor.u32 %v511, %v512
    %v514 = vshll.u32 2102212464, %v502
    %v515 = vshrl.u32 920167782, %v503
    %v516 = vor.u32 %v514, %v515
    %v517 = vshll.u32 920167782, %v502
    %v518 = vshrl.u32 1326507024, %v503
    %v519 = vor.u32 %v517, %v518
    %vm520 = vcmp.lt.s32.totalorder %v501, 1
    %vm521 = vcmp.lt.s32.totalorder %v501, 2
    %vm522 = vcmp.lt.s32.totalorder %v501, 3
    %vm523 = vcmp.lt.s32.totalorder %v501, 4
    %v524 = vsel %vm520, %v504, %v507
    %v525 = vsel %vm523, %v513, 2102212464
    %v526 = vsel %vm522, %v510, %v525
    %v527 = vsel %vm521, %v524, %v526
    %v528 = vsel %vm520, %v507, %v510
    %v529 = vsel %vm523, %v516, 920167782
    %v530 = vsel %vm522, %v513, %v529
    %v531 = vsel %vm521, %v528, %v530
    %v532 = vsel %vm520, %v510, %v513
    %v533 = vsel %vm523, %v519, 1326507024
    %v534 = vsel %vm522, %v516, %v533
    %v535 = vsel %vm521, %v532, %v534
    %v536 = vshll.u32 %v496, 8
    %v537 = vmul.u32.u64.compose %v536, %v535
    %v538 = vextract.low.u32 %v537
    %v539 = vextract.high.u32 %v537
    %v540 = vmul.u32.u64.compose %v536, %v531
    %v541 = vextract.low.u32 %v540
    %v542 = vextract.high.u32 %v540
    %v543 = vmul.u32 %v536, %v527
    %v544 = vadd.s32 %v539, %v541
    %vm545 = vc.u32 %v539, %v541
    %v546 = vadd.s32 %v542, 1
    %v547 = vsel %vm545, %v546, %v542
    %v548 = vadd.s32 %v543, %v547
    %v549 = vadd.s32 %v548, 536870912
    %v550 = vshrl.u32 %v549, 30
    %v551 = vshll.u32 %v550, 30
    %v552 = vsub.s32 %v548, %v551
    %vm553 = vcmp.lt.s32.totalorder %v552, 0
    %v554 = vsub.s32 0, %v552
    %v555 = vsel %vm553, %v554, %v552
    %v556 = vclz %v555
    %v557 = vsub.s32 %v556, 2
    %vm558 = vcmp.gt.s32.totalorder 0, %v557
    %v559 = vsel %vm558, 0, %v557
    %v560 = vsub.s32 32, %v559
    %v561 = vshll.u32 %v552, %v559
    %v562 = vshrl.u32 %v544, %v560
    %v563 = vor.u32 %v561, %v562
    %v564 = vsub.s32 4294967266, %v559
    %v565 = vadd.s32 %v564, 127
    %v566 = vshll.u32 %v565, 23
    %v567 = vor.u32 4788187, %v566
    %v568 = vand.u32 2147483647, %v567
    %v570 = vcvt.s32.f32 %v563
    %v571 = vmul.f32 %v570, %v568
    %v572 = vxor.u32 %v571, 2147483648
    %v573 = vsel %vm490, %v572, %v571
    %v574 = vsub.s32 4, %v550
    %v575 = vsel %vm490, %v574, %v550
    %v576 = vsel %vm489, %v331, %v573
    %v577 = vsel %vm489, 0, %v575
    %v578 = vcosq.f32.pop %v576
    %v579 = vsinq.f32.pop %v576
    %vm580 = vweird.f32 %v331
    %v581 = vand.u32 %v577, 3
    %vm582 = vcmp.lt.s32.totalorder %v581, 2
    %vm583 = vcmp.eq.s32.totalorder %v581, 0
    %v584 = vxor.u32 %v579, 2147483648
    %v585 = vsel %vm583, %v578, %v584
    %vm586 = vcmp.eq.s32.totalorder %v581, 2
    %v587 = vxor.u32 %v578, 2147483648
    %v588 = vsel %vm586, %v587, %v579
    %v589 = vsel %vm582, %v585, %v588
    %v590 = vsel %vm580, nan, %v589
    %v591 = vmul.f32 %v254, %v590
    %v592 = vadd.f32 %v413, %v591
    %v593 = vand.u32 2147483647, %v331
    %vm594 = vcmp.le.f32.partialorder %v593, 0.7853982
    %vm595 = vcmp.lt.s32.totalorder %v331, 0
    %v596 = vand.u32 %v331, 2139095040
    %v597 = vshrl.u32 %v596, 23
    %v598 = vsub.s32 %v597, 127
    %v599 = vand.u32 2147483647, %v331
    %v600 = vand.u32 %v599, 8388607
    %v601 = vor.u32 %v600, 8388608
    %v602 = vsub.s32 0, %v601
    %v603 = vadd.s32 %v598, 1
    %vm604 = vcmp.gt.s32.totalorder %v603, 0
    %v605 = vsel %vm604, %v603, 0
    %v606 = vshrl.u32 %v605, 5
    %v607 = vand.u32 %v605, 31
    %v608 = vsub.s32 32, %v607
    %v609 = vshrl.u32 683565275, %v608
    %v610 = vshll.u32 683565275, %v607
    %v611 = vshrl.u32 2475754826, %v608
    %v612 = vor.u32 %v610, %v611
    %v613 = vshll.u32 2475754826, %v607
    %v614 = vshrl.u32 2131351028, %v608
    %v615 = vor.u32 %v613, %v614
    %v616 = vshll.u32 2131351028, %v607
    %v617 = vshrl.u32 2102212464, %v608
    %v618 = vor.u32 %v616, %v617
    %v619 = vshll.u32 2102212464, %v607
    %v620 = vshrl.u32 920167782, %v608
    %v621 = vor.u32 %v619, %v620
    %v622 = vshll.u32 920167782, %v607
    %v623 = vshrl.u32 1326507024, %v608
    %v624 = vor.u32 %v622, %v623
    %vm625 = vcmp.lt.s32.totalorder %v606, 1
    %vm626 = vcmp.lt.s32.totalorder %v606, 2
    %vm627 = vcmp.lt.s32.totalorder %v606, 3
    %vm628 = vcmp.lt.s32.totalorder %v606, 4
    %v629 = vsel %vm625, %v609, %v612
    %v630 = vsel %vm628, %v618, 2102212464
    %v631 = vsel %vm627, %v615, %v630
    %v632 = vsel %vm626, %v629, %v631
    %v633 = vsel %vm625, %v612, %v615
    %v634 = vsel %vm628, %v621, 920167782
    %v635 = vsel %vm627, %v618, %v634
    %v636 = vsel %vm626, %v633, %v635
    %v637 = vsel %vm625, %v615, %v618
    %v638 = vsel %vm628, %v624, 1326507024
    %v639 = vsel %vm627, %v621, %v638
    %v640 = vsel %vm626, %v637, %v639
    %v641 = vshll.u32 %v601, 8
    %v642 = vmul.u32.u64.compose %v641, %v640
    %v643 = vextract.low.u32 %v642
    %v644 = vextract.high.u32 %v642
    %v645 = vmul.u32.u64.compose %v641, %v636
    %v646 = vextract.low.u32 %v645
    %v647 = vextract.high.u32 %v645
    %v648 = vmul.u32 %v641, %v632
    %v649 = vadd.s32 %v644, %v646
    %vm650 = vc.u32 %v644, %v646
    %v651 = vadd.s32 %v647, 1
    %v652 = vsel %vm650, %v651, %v647
    %v653 = vadd.s32 %v648, %v652
    %v654 = vadd.s32 %v653, 536870912
    %v655 = vshrl.u32 %v654, 30
    %v656 = vshll.u32 %v655, 30
    %v657 = vsub.s32 %v653, %v656
    %vm658 = vcmp.lt.s32.totalorder %v657, 0
    %v659 = vsub.s32 0, %v657
    %v660 = vsel %vm658, %v659, %v657
    %v661 = vclz %v660
    %v662 = vsub.s32 %v661, 2
    %vm663 = vcmp.gt.s32.totalorder 0, %v662
    %v664 = vsel %vm663, 0, %v662
    %v665 = vsub.s32 32, %v664
    %v666 = vshll.u32 %v657, %v664
    %v667 = vshrl.u32 %v649, %v665
    %v668 = vor.u32 %v666, %v667
    %v669 = vsub.s32 4294967266, %v664
    %v670 = vadd.s32 %v669, 127
    %v671 = vshll.u32 %v670, 23
    %v672 = vor.u32 4788187, %v671
    %v673 = vand.u32 2147483647, %v672
    %v675 = vcvt.s32.f32 %v668
    %v676 = vmul.f32 %v675, %v673
    %v677 = vxor.u32 %v676, 2147483648
    %v678 = vsel %vm595, %v677, %v676
    %v679 = vsub.s32 4, %v655
    %v680 = vsel %vm595, %v679, %v655
    %v681 = vsel %vm594, %v331, %v678
    %v682 = vsel %vm594, 0, %v680
    %v683 = vcosq.f32.pop %v681
    %v684 = vsinq.f32.pop %v681
    %vm685 = vweird.f32 %v331
    %v686 = vadd.s32 %v682, 3
    %v687 = vand.u32 %v686, 3
    %vm688 = vcmp.lt.s32.totalorder %v687, 2
    %vm689 = vcmp.eq.s32.totalorder %v687, 0
    %v690 = vxor.u32 %v684, 2147483648
    %v691 = vsel %vm689, %v683, %v690
    %vm692 = vcmp.eq.s32.totalorder %v687, 2
    %v693 = vxor.u32 %v683, 2147483648
    %v694 = vsel %vm692, %v693, %v684
    %v695 = vsel %vm688, %v691, %v694
    %v696 = vsel %vm685, nan, %v695
    %v697 = vmul.f32 %v254, %v696
    %v698 = vadd.f32 %v487, %v697
    %699 = vmatprep.subr.mxu0 0.0
    %700 = vmatpush1.msra.mxu0 %v146
    %701 = vmatprep.subr.mxu0 0.0
    %702 = vmatpush1.msra.mxu0 %v147
    %703 = vmatprep.subr.mxu0 0.0
    %704 = vmatpush1.msra.mxu0 %v148
    %705 = vmatprep.subr.mxu0 0.0
    %706 = vmatpush1.msra.mxu0 %v149
    %707 = vmatprep.subr.mxu0 0.0
    %708 = vmatpush1.msra.mxu0 %v150
    %709 = vmatprep.subr.mxu0 0.0
    %710 = vmatpush1.msra.mxu0 %v151
    %711 = vmatprep.subr.mxu0 0.0
    %712 = vmatpush1.msra.mxu0 %v152
    %713 = vmatprep.subr.mxu0 0.0
    %714 = vmatpush1.msra.mxu0 %v153
    %715 = vmatprep.subr.mxu0 0.0
    %716 = vmatpush1.msra.mxu0 %v154
    %717 = vmatprep.subr.mxu0 0.0
    %718 = vmatpush1.msra.mxu0 %v155
    %719 = vmatprep.subr.mxu0 0.0
    %720 = vmatpush1.msra.mxu0 %v156
    %721 = vmatprep.subr.mxu0 0.0
    %722 = vmatpush1.msra.mxu0 %v157
    %723 = vmatprep.subr.mxu0 0.0
    %724 = vmatpush1.msra.mxu0 %v158
    %725 = vmatprep.subr.mxu0 0.0
    %726 = vmatpush1.msra.mxu0 %v159
    %727 = vmatprep.subr.mxu0 0.0
    %728 = vmatpush1.msra.mxu0 %v160
    %729 = vmatprep.subr.mxu0 0.0
    %730 = vmatpush1.msra.mxu0 %v161
    %731 = vmatprep.subr.mxu0 0.0
    %732 = vmatpush1.msra.mxu0 0.0
    %733 = vmatprep.subr.mxu0 0.0
    %734 = vmatpush1.msra.mxu0 0.0
    %735 = vmatprep.subr.mxu0 0.0
    %736 = vmatpush1.msra.mxu0 0.0
    %737 = vmatprep.subr.mxu0 0.0
    %738 = vmatpush1.msra.mxu0 0.0
    %739 = vmatprep.subr.mxu0 0.0
    %740 = vmatpush1.msra.mxu0 0.0
    %741 = vmatprep.subr.mxu0 0.0
    %742 = vmatpush1.msra.mxu0 0.0
    %743 = vmatprep.subr.mxu0 0.0
    %744 = vmatpush1.msra.mxu0 0.0
    %745 = vmatprep.subr.mxu0 0.0
    %746 = vmatpush1.msra.mxu0 0.0
    %747 = vmatprep.subr.mxu0 0.0
    %748 = vmatpush1.msra.mxu0 0.0
    %749 = vmatprep.subr.mxu0 0.0
    %750 = vmatpush1.msra.mxu0 0.0
    %751 = vmatprep.subr.mxu0 0.0
    %752 = vmatpush1.msra.mxu0 0.0
    %753 = vmatprep.subr.mxu0 0.0
    %754 = vmatpush1.msra.mxu0 0.0
    %755 = vmatprep.subr.mxu0 0.0
    %756 = vmatpush1.msra.mxu0 0.0
    %757 = vmatprep.subr.mxu0 0.0
    %758 = vmatpush1.msra.mxu0 0.0
    %759 = vmatprep.subr.mxu0 0.0
    %760 = vmatpush1.msra.mxu0 0.0
    %761 = vmatprep.subr.mxu0 0.0
    %762 = vmatpush1.msra.mxu0 0.0
    %763 = vmatprep.mubr.f32.mxu0 0.0
    %764 = vmatmul.mubr.f32.gmra.mrb[0].mxu0 %v592
    %v765 = vpop.f32.mrb[0].mxu0
    %v766 = vadd.f32 0.0, %v765
    %v767 = vpop.f32.mrb[0].mxu0
    %768 = vdwg.mxu0
    %v769 = vsub.f32 %v592, %v766
    %v770 = vmul.f32 %v769, %v769
    %771 = vmatprep.subr.mxu0 0.0
    %772 = vmatpush1.msra.mxu0 %v146
    %773 = vmatprep.subr.mxu0 0.0
    %774 = vmatpush1.msra.mxu0 %v147
    %775 = vmatprep.subr.mxu0 0.0
    %776 = vmatpush1.msra.mxu0 %v148
    %777 = vmatprep.subr.mxu0 0.0
    %778 = vmatpush1.msra.mxu0 %v149
    %779 = vmatprep.subr.mxu0 0.0
    %780 = vmatpush1.msra.mxu0 %v150
    %781 = vmatprep.subr.mxu0 0.0
    %782 = vmatpush1.msra.mxu0 %v151
    %783 = vmatprep.subr.mxu0 0.0
    %784 = vmatpush1.msra.mxu0 %v152
    %785 = vmatprep.subr.mxu0 0.0
    %786 = vmatpush1.msra.mxu0 %v153
    %787 = vmatprep.subr.mxu0 0.0
    %788 = vmatpush1.msra.mxu0 %v154
    %789 = vmatprep.subr.mxu0 0.0
    %790 = vmatpush1.msra.mxu0 %v155
    %791 = vmatprep.subr.mxu0 0.0
    %792 = vmatpush1.msra.mxu0 %v156
    %793 = vmatprep.subr.mxu0 0.0
    %794 = vmatpush1.msra.mxu0 %v157
    %795 = vmatprep.subr.mxu0 0.0
    %796 = vmatpush1.msra.mxu0 %v158
    %797 = vmatprep.subr.mxu0 0.0
    %798 = vmatpush1.msra.mxu0 %v159
    %799 = vmatprep.subr.mxu0 0.0
    %800 = vmatpush1.msra.mxu0 %v160
    %801 = vmatprep.subr.mxu0 0.0
    %802 = vmatpush1.msra.mxu0 %v161
    %803 = vmatprep.subr.mxu0 0.0
    %804 = vmatpush1.msra.mxu0 0.0
    %805 = vmatprep.subr.mxu0 0.0
    %806 = vmatpush1.msra.mxu0 0.0
    %807 = vmatprep.subr.mxu0 0.0
    %808 = vmatpush1.msra.mxu0 0.0
    %809 = vmatprep.subr.mxu0 0.0
    %810 = vmatpush1.msra.mxu0 0.0
    %811 = vmatprep.subr.mxu0 0.0
    %812 = vmatpush1.msra.mxu0 0.0
    %813 = vmatprep.subr.mxu0 0.0
    %814 = vmatpush1.msra.mxu0 0.0
    %815 = vmatprep.subr.mxu0 0.0
    %816 = vmatpush1.msra.mxu0 0.0
    %817 = vmatprep.subr.mxu0 0.0
    %818 = vmatpush1.msra.mxu0 0.0
    %819 = vmatprep.subr.mxu0 0.0
    %820 = vmatpush1.msra.mxu0 0.0
    %821 = vmatprep.subr.mxu0 0.0
    %822 = vmatpush1.msra.mxu0 0.0
    %823 = vmatprep.subr.mxu0 0.0
    %824 = vmatpush1.msra.mxu0 0.0
    %825 = vmatprep.subr.mxu0 0.0
    %826 = vmatpush1.msra.mxu0 0.0
    %827 = vmatprep.subr.mxu0 0.0
    %828 = vmatpush1.msra.mxu0 0.0
    %829 = vmatprep.subr.mxu0 0.0
    %830 = vmatpush1.msra.mxu0 0.0
    %831 = vmatprep.subr.mxu0 0.0
    %832 = vmatpush1.msra.mxu0 0.0
    %833 = vmatprep.subr.mxu0 0.0
    %834 = vmatpush1.msra.mxu0 0.0
    %835 = vmatprep.mubr.f32.mxu0 0.0
    %836 = vmatmul.mubr.f32.gmra.mrb[0].mxu0 %v770
    %v837 = vpop.f32.mrb[0].mxu0
    %v838 = vadd.f32 1e-05, %v837
    %v839 = vpop.f32.mrb[0].mxu0
    %840 = vdwg.mxu0
    %v841 = vrsqrt.pop %v838
    %v842 = vmul.f32 %v769, %v841
    %v844 = vlaneseq
    %v845 = vshrl.u32 %v844, 7
    %v846 = vsub.s32 0, %v845
    %v847 = vrot.slane %v162, %v846
    %v849 = vmul.f32 %v842, %v847
    %v851 = vlaneseq
    %v852 = vshrl.u32 %v851, 7
    %v853 = vsub.s32 0, %v852
    %v854 = vrot.slane %v163, %v853
    %v856 = vadd.f32 %v849, %v854
    %857 = vmatprep.subr.mxu0 0.0
    %858 = vmatpush1.msra.mxu0 %v146
    %859 = vmatprep.subr.mxu0 0.0
    %860 = vmatpush1.msra.mxu0 %v147
    %861 = vmatprep.subr.mxu0 0.0
    %862 = vmatpush1.msra.mxu0 %v148
    %863 = vmatprep.subr.mxu0 0.0
    %864 = vmatpush1.msra.mxu0 %v149
    %865 = vmatprep.subr.mxu0 0.0
    %866 = vmatpush1.msra.mxu0 %v150
    %867 = vmatprep.subr.mxu0 0.0
    %868 = vmatpush1.msra.mxu0 %v151
    %869 = vmatprep.subr.mxu0 0.0
    %870 = vmatpush1.msra.mxu0 %v152
    %871 = vmatprep.subr.mxu0 0.0
    %872 = vmatpush1.msra.mxu0 %v153
    %873 = vmatprep.subr.mxu0 0.0
    %874 = vmatpush1.msra.mxu0 %v154
    %875 = vmatprep.subr.mxu0 0.0
    %876 = vmatpush1.msra.mxu0 %v155
    %877 = vmatprep.subr.mxu0 0.0
    %878 = vmatpush1.msra.mxu0 %v156
    %879 = vmatprep.subr.mxu0 0.0
    %880 = vmatpush1.msra.mxu0 %v157
    %881 = vmatprep.subr.mxu0 0.0
    %882 = vmatpush1.msra.mxu0 %v158
    %883 = vmatprep.subr.mxu0 0.0
    %884 = vmatpush1.msra.mxu0 %v159
    %885 = vmatprep.subr.mxu0 0.0
    %886 = vmatpush1.msra.mxu0 %v160
    %887 = vmatprep.subr.mxu0 0.0
    %888 = vmatpush1.msra.mxu0 %v161
    %889 = vmatprep.subr.mxu0 0.0
    %890 = vmatpush1.msra.mxu0 0.0
    %891 = vmatprep.subr.mxu0 0.0
    %892 = vmatpush1.msra.mxu0 0.0
    %893 = vmatprep.subr.mxu0 0.0
    %894 = vmatpush1.msra.mxu0 0.0
    %895 = vmatprep.subr.mxu0 0.0
    %896 = vmatpush1.msra.mxu0 0.0
    %897 = vmatprep.subr.mxu0 0.0
    %898 = vmatpush1.msra.mxu0 0.0
    %899 = vmatprep.subr.mxu0 0.0
    %900 = vmatpush1.msra.mxu0 0.0
    %901 = vmatprep.subr.mxu0 0.0
    %902 = vmatpush1.msra.mxu0 0.0
    %903 = vmatprep.subr.mxu0 0.0
    %904 = vmatpush1.msra.mxu0 0.0
    %905 = vmatprep.subr.mxu0 0.0
    %906 = vmatpush1.msra.mxu0 0.0
    %907 = vmatprep.subr.mxu0 0.0
    %908 = vmatpush1.msra.mxu0 0.0
    %909 = vmatprep.subr.mxu0 0.0
    %910 = vmatpush1.msra.mxu0 0.0
    %911 = vmatprep.subr.mxu0 0.0
    %912 = vmatpush1.msra.mxu0 0.0
    %913 = vmatprep.subr.mxu0 0.0
    %914 = vmatpush1.msra.mxu0 0.0
    %915 = vmatprep.subr.mxu0 0.0
    %916 = vmatpush1.msra.mxu0 0.0
    %917 = vmatprep.subr.mxu0 0.0
    %918 = vmatpush1.msra.mxu0 0.0
    %919 = vmatprep.subr.mxu0 0.0
    %920 = vmatpush1.msra.mxu0 0.0
    %921 = vmatprep.mubr.f32.mxu0 0.0
    %922 = vmatmul.mubr.f32.gmra.mrb[0].mxu0 %v698
    %v923 = vpop.f32.mrb[0].mxu0
    %v924 = vadd.f32 0.0, %v923
    %v925 = vpop.f32.mrb[0].mxu0
    %926 = vdwg.mxu0
    %v927 = vsub.f32 %v698, %v924
    %v928 = vmul.f32 %v927, %v927
    %929 = vmatprep.subr.mxu0 0.0
    %930 = vmatpush1.msra.mxu0 %v146
    %931 = vmatprep.subr.mxu0 0.0
    %932 = vmatpush1.msra.mxu0 %v147
    %933 = vmatprep.subr.mxu0 0.0
    %934 = vmatpush1.msra.mxu0 %v148
    %935 = vmatprep.subr.mxu0 0.0
    %936 = vmatpush1.msra.mxu0 %v149
    %937 = vmatprep.subr.mxu0 0.0
    %938 = vmatpush1.msra.mxu0 %v150
    %939 = vmatprep.subr.mxu0 0.0
    %940 = vmatpush1.msra.mxu0 %v151
    %941 = vmatprep.subr.mxu0 0.0
    %942 = vmatpush1.msra.mxu0 %v152
    %943 = vmatprep.subr.mxu0 0.0
    %944 = vmatpush1.msra.mxu0 %v153
    %945 = vmatprep.subr.mxu0 0.0
    %946 = vmatpush1.msra.mxu0 %v154
    %947 = vmatprep.subr.mxu0 0.0
    %948 = vmatpush1.msra.mxu0 %v155
    %949 = vmatprep.subr.mxu0 0.0
    %950 = vmatpush1.msra.mxu0 %v156
    %951 = vmatprep.subr.mxu0 0.0
    %952 = vmatpush1.msra.mxu0 %v157
    %953 = vmatprep.subr.mxu0 0.0
    %954 = vmatpush1.msra.mxu0 %v158
    %955 = vmatprep.subr.mxu0 0.0
    %956 = vmatpush1.msra.mxu0 %v159
    %957 = vmatprep.subr.mxu0 0.0
    %958 = vmatpush1.msra.mxu0 %v160
    %959 = vmatprep.subr.mxu0 0.0
    %960 = vmatpush1.msra.mxu0 %v161
    %961 = vmatprep.subr.mxu0 0.0
    %962 = vmatpush1.msra.mxu0 0.0
    %963 = vmatprep.subr.mxu0 0.0
    %964 = vmatpush1.msra.mxu0 0.0
    %965 = vmatprep.subr.mxu0 0.0
    %966 = vmatpush1.msra.mxu0 0.0
    %967 = vmatprep.subr.mxu0 0.0
    %968 = vmatpush1.msra.mxu0 0.0
    %969 = vmatprep.subr.mxu0 0.0
    %970 = vmatpush1.msra.mxu0 0.0
    %971 = vmatprep.subr.mxu0 0.0
    %972 = vmatpush1.msra.mxu0 0.0
    %973 = vmatprep.subr.mxu0 0.0
    %974 = vmatpush1.msra.mxu0 0.0
    %975 = vmatprep.subr.mxu0 0.0
    %976 = vmatpush1.msra.mxu0 0.0
    %977 = vmatprep.subr.mxu0 0.0
    %978 = vmatpush1.msra.mxu0 0.0
    %979 = vmatprep.subr.mxu0 0.0
    %980 = vmatpush1.msra.mxu0 0.0
    %981 = vmatprep.subr.mxu0 0.0
    %982 = vmatpush1.msra.mxu0 0.0
    %983 = vmatprep.subr.mxu0 0.0
    %984 = vmatpush1.msra.mxu0 0.0
    %985 = vmatprep.subr.mxu0 0.0
    %986 = vmatpush1.msra.mxu0 0.0
    %987 = vmatprep.subr.mxu0 0.0
    %988 = vmatpush1.msra.mxu0 0.0
    %989 = vmatprep.subr.mxu0 0.0
    %990 = vmatpush1.msra.mxu0 0.0
    %991 = vmatprep.subr.mxu0 0.0
    %992 = vmatpush1.msra.mxu0 0.0
    %993 = vmatprep.mubr.f32.mxu0 0.0
    %994 = vmatmul.mubr.f32.gmra.mrb[0].mxu0 %v928
    %v995 = vpop.f32.mrb[0].mxu0
    %v996 = vadd.f32 1e-05, %v995
    %v997 = vpop.f32.mrb[0].mxu0
    %998 = vdwg.mxu0
    %v999 = vrsqrt.pop %v996
    %v1000 = vmul.f32 %v927, %v999
    %v1002 = vlaneseq
    %v1003 = vshrl.u32 %v1002, 7
    %v1004 = vsub.s32 0, %v1003
    %v1005 = vrot.slane %v164, %v1004
    %v1007 = vmul.f32 %v1000, %v1005
    %v1009 = vlaneseq
    %v1010 = vshrl.u32 %v1009, 7
    %v1011 = vsub.s32 0, %v1010
    %v1012 = vrot.slane %v165, %v1011
    %v1014 = vadd.f32 %v1007, %v1012
    %1015 = vst [vmem:[#allocation13] sm:$0xff] %v856
    %1016 = vst [vmem:[#allocation14] sm:$0xff] %v1014
    // Predicated region
    $region78: #{tpu_custom_call.1} parent=1 // pred_check
      _
    $region79: #{tpu_custom_call.1} parent=1 // pred_check_branch
      %1018 = sbr.rel (0) target = $region81
    $region80: #{tpu_custom_call.1} parent=1 // pred_region
      %s1020 = ssub.s32 128, 128
      %1021 = vsyncadd [#allocation4], %s1020
      %s1023 = sshll.u32 [#allocation13], 4
      %s1024 = int_to_ptr.vmem [resolvable:$true] %s1023
      %1026 = dma.vmem_to_hbm [thread:$0]  %s1024, 128, %s13, [#allocation4]
    $region81: #{tpu_custom_call.1} parent=1 // pred_fallthru
      _
    // Predicated region
    $region82: #{tpu_custom_call.1} parent=1 // pred_check
      _
    $region83: #{tpu_custom_call.1} parent=1 // pred_check_branch
      %1028 = sbr.rel (0) target = $region85
    $region84: #{tpu_custom_call.1} parent=1 // pred_region
      %s1030 = ssub.s32 128, 128
      %1031 = vsyncadd [#allocation15], %s1030
      %s1033 = sshll.u32 [#allocation14], 4
      %s1034 = int_to_ptr.vmem [resolvable:$true] %s1033
      %1036 = dma.vmem_to_hbm [thread:$0]  %s1034, 128, %s14, [#allocation15]
    $region85: #{tpu_custom_call.1} parent=1 // pred_fallthru
      _
    // Predicated region
    $region86: #{tpu_custom_call.1} parent=1 // pred_check
      _
    $region87: #{tpu_custom_call.1} parent=1 // pred_check_branch
      %1038 = sbr.rel (0) target = $region89
    $region88: #{tpu_custom_call.1} parent=1 // pred_region
      %1039 = dma.done [#allocation4], 128
    $region89: #{tpu_custom_call.1} parent=1 // pred_fallthru
      _
    // Predicated region
    $region90: #{tpu_custom_call.1} parent=1 // pred_check
      _
    $region91: #{tpu_custom_call.1} parent=1 // pred_check_branch
      %1041 = sbr.rel (0) target = $region93
    $region92: #{tpu_custom_call.1} parent=1 // pred_region
      %1042 = dma.done [#allocation15], 128
    $region93: #{tpu_custom_call.1} parent=1 // pred_fallthru
      _
    %1043 = vsyncpa [#allocation3], 1
    %1044 = vsyncpa [#allocation6], 1
    %1045 = vsyncpa [#allocation9], 1
    %1046 = vsyncpa [#allocation12], 1
    %1047 = vsyncpa [#allocation4], 1
    %1048 = vsyncpa [#allocation15], 1

</llo_original>
